<compile_context>
chip_gen: v7x
topology: tpu7x:2x2x1
jax: 0.10.0
libtpu: 0.0.40
codegen_flags: <defaults>
</compile_context>

<pallas_src>
import jax
import jax.numpy as jnp
from jax.experimental import pallas as pl
from jax.experimental.pallas import tpu as pltpu


def _round_up(v, m):
    return (v + m - 1) // m * m


def _sublane(dtype):
    # Minimum second-to-last tile dim: 8 for 4-byte, 16 for 2-byte, 32 for 1-byte.
    return max(8, 32 // jnp.dtype(dtype).itemsize)


def mlp_kernel(x_ref, w1_ref, b1_ref, w2_ref, b2_ref, o_ref):
    # x_ref:  (TN, IN)      f32
    # w1_ref: (IN, HID)     bf16, b1_ref: (1, HID) f32
    # w2_ref: (HID, OUT)    bf16, b2_ref: (1, OUT) f32
    # o_ref:  (TN, OUT)     f32
    x = x_ref[...]

    # lin1: bf16 operands -> f32 MXU accumulate; bias + ReLU epilogue in f32.
    h = jnp.dot(x.astype(w1_ref.dtype), w1_ref[...],
                preferred_element_type=jnp.float32)
    h = jnp.maximum(h + b1_ref[...], 0.0)

    # dropout(p=0.5, training=False) == identity.
    # TODO(synk): training-mode dropout would use pltpu.prng_seed / prng_random_bits.

    # lin2: bf16 operands -> f32 accumulate; bias + ReLU in f32.
    y = jnp.dot(h.astype(w2_ref.dtype), w2_ref[...],
                preferred_element_type=jnp.float32)
    y = jnp.maximum(y + b2_ref[...], 0.0)

    o_ref[...] = y.astype(o_ref.dtype)


def prepare_params(w1, b1, w2, b2, mxu_dtype=jnp.bfloat16):
    """One-time parameter prep (hoisted out of the per-call path).

    Weights cast to the MXU feed dtype (bf16); biases kept in f32 and shaped
    (1, features) so they broadcast lane-major inside the kernel.
    Idempotent: calling it on already-prepared params is a no-op.
    """
    return (jnp.asarray(w1, mxu_dtype),
            jnp.asarray(b1, jnp.float32).reshape(1, -1),
            jnp.asarray(w2, mxu_dtype),
            jnp.asarray(b2, jnp.float32).reshape(1, -1))


def _vmem_estimate_bytes(tn, in_c, hid, out_c, x_itemsize, w_itemsize, out_itemsize):
    x_tiles = 2 * tn * in_c * x_itemsize              # double-buffered x tiles
    o_tiles = 2 * tn * out_c * out_itemsize           # double-buffered out tiles
    # Conservative: budget weights at 2 buffers even though we request Buffered(1).
    weights = 2 * ((in_c * hid + hid * out_c) * w_itemsize + (hid + out_c) * 4)
    interm = tn * hid * (4 + w_itemsize) + tn * out_c * 4   # h (f32 + bf16 copy), y (f32)
    return x_tiles + o_tiles + weights + interm


def _pallas_mlp(x, w1, b1, w2, b2, tn, grid_n, vmem_limit_bytes, single_buffer_weights):
    n, in_c = x.shape
    hid = w1.shape[1]
    out_c = w2.shape[1]

    resident = {}
    if single_buffer_weights and hasattr(pl, "Buffered"):
        # Grid-invariant operands (constant index_map): one VMEM buffer suffices.
        resident = dict(pipeline_mode=pl.Buffered(1))

    flops = 2 * n * (in_c * hid + hid * out_c)
    bytes_accessed = (x.size * x.dtype.itemsize
                      + w1.size * w1.dtype.itemsize + b1.size * 4
                      + w2.size * w2.dtype.itemsize + b2.size * 4
                      + n * out_c * x.dtype.itemsize)

    return pl.pallas_call(
        mlp_kernel,
        out_shape=jax.ShapeDtypeStruct((n, out_c), x.dtype),
        grid=(grid_n,),
        in_specs=[
            # x row-tile streams over the grid. Last dim == full array dim, so no
            # lane padding and no padded HBM copy of x. Partial last block is masked.
            pl.BlockSpec((tn, in_c), lambda i: (i, 0)),
            # Weights / biases stay resident in VMEM across all grid steps.
            pl.BlockSpec((in_c, hid), lambda i: (0, 0), **resident),
            pl.BlockSpec((1, hid), lambda i: (0, 0), **resident),
            pl.BlockSpec((hid, out_c), lambda i: (0, 0), **resident),
            pl.BlockSpec((1, out_c), lambda i: (0, 0), **resident),
        ],
        out_specs=pl.BlockSpec((tn, out_c), lambda i: (i, 0)),
        compiler_params=pltpu.CompilerParams(
            # Independent row tiles -> shard across TensorCores (v7x megacore).
            dimension_semantics=("parallel",),
            vmem_limit_bytes=vmem_limit_bytes,
        ),
        cost_estimate=pl.CostEstimate(
            flops=flops, transcendentals=0, bytes_accessed=bytes_accessed),
    )(x, w1, b1, w2, b2)


def mlp_forward(x, w1, b1, w2, b2, *, row_tile=512, mxu_dtype=jnp.bfloat16):
    """x: [N, IN]; w1: [IN, HID]; b1: [HID] or [1,HID]; w2: [HID, OUT]; b2: [OUT] or [1,OUT]."""
    w1, b1, w2, b2 = prepare_params(w1, b1, w2, b2, mxu_dtype)  # no-op if pre-prepared
    n, in_c = x.shape
    hid = w1.shape[1]
    out_c = w2.shape[1]

    sub = _sublane(x.dtype)
    # Sublane-aligned row tile, capped at ceil(N/2) so that (when N allows) there
    # are >= 2 grid steps -> both TensorCores busy on v7x megacore.
    tn = max(sub, min(_round_up(row_tile, sub), _round_up(pl.cdiv(n, 2), sub)))

    # VMEM budgeting (per core): shrink the row tile until the working set fits.
    vmem_budget = 20 * 1024 * 1024
    w_itemsize = jnp.dtype(mxu_dtype).itemsize
    while tn > sub and _vmem_estimate_bytes(
            tn, in_c, hid, out_c, x.dtype.itemsize, w_itemsize,
            x.dtype.itemsize) > vmem_budget:
        tn = max(sub, _round_up(tn // 2, sub))

    grid_n = pl.cdiv(n, tn)  # partial last block: OOB reads harmless, OOB writes masked
    est = _vmem_estimate_bytes(tn, in_c, hid, out_c, x.dtype.itemsize,
                               w_itemsize, x.dtype.itemsize)
    vmem_limit = min(max(int(est * 1.5) + (2 << 20), 16 * 1024 * 1024),
                     48 * 1024 * 1024)

    try:
        return _pallas_mlp(x, w1, b1, w2, b2, tn, grid_n, vmem_limit,
                           single_buffer_weights=True)
    except Exception:
        # pipeline_mode=pl.Buffered(1) not supported by this jax version/backend:
        # fall back to default double-buffering (identical results, slightly more VMEM).
        return _pallas_mlp(x, w1, b1, w2, b2, tn, grid_n, vmem_limit,
                           single_buffer_weights=False)


def init_params(key, in_channels, hidden_channels, out_channels):
    """Deterministic init mimicking torch.nn.Linear (uniform +/- 1/sqrt(fan_in)).
    Weights stored as [in_features, out_features] (transposed vs torch)."""
    k1, k2, k3, k4 = jax.random.split(key, 4)
    bound1 = 1.0 / (in_channels ** 0.5)
    bound2 = 1.0 / (hidden_channels ** 0.5)
    w1 = jax.random.uniform(k1, (in_channels, hidden_channels),
                            minval=-bound1, maxval=bound1, dtype=jnp.float32)
    b1 = jax.random.uniform(k2, (hidden_channels,),
                            minval=-bound1, maxval=bound1, dtype=jnp.float32)
    w2 = jax.random.uniform(k3, (hidden_channels, out_channels),
                            minval=-bound2, maxval=bound2, dtype=jnp.float32)
    b2 = jax.random.uniform(k4, (out_channels,),
                            minval=-bound2, maxval=bound2, dtype=jnp.float32)
    return w1, b1, w2, b2


def mlp_reference_f32(x, w1, b1, w2, b2):
    h = jnp.maximum(x @ w1 + b1, 0.0)
    return jnp.maximum(h @ w2 + b2, 0.0)


def mlp_reference_bf16_feed(x, w1, b1, w2, b2, mxu_dtype=jnp.bfloat16):
    """Emulates exactly what the kernel computes: bf16 operands, f32 accumulate,
    f32 bias+ReLU epilogues."""
    f32 = jnp.float32

    def mm(a, b):
        return jnp.dot(a.astype(mxu_dtype).astype(f32),
                       b.astype(mxu_dtype).astype(f32),
                       preferred_element_type=f32)

    h = jnp.maximum(mm(x, w1) + b1, 0.0)
    return jnp.maximum(mm(h, w2) + b2, 0.0)


if __name__ == "__main__":
    key = jax.random.PRNGKey(0)
    in_channels, hidden_channels, out_channels = 16, 32, 8
    n_nodes = 8

    kx, kp = jax.random.split(key)
    x = jax.random.normal(kx, (n_nodes, in_channels), dtype=jnp.float32)
    w1, b1, w2, b2 = init_params(kp, in_channels, hidden_channels, out_channels)

    # One-time (hoisted) param prep: bf16 weight cast + bias reshape.
    params = prepare_params(w1, b1, w2, b2)

    out = jax.block_until_ready(mlp_forward(x, *params))
    assert out.shape == (n_nodes, out_channels)
    assert jnp.allclose(out, mlp_reference_bf16_feed(x, w1, b1, w2, b2),
                        atol=1e-4, rtol=1e-4)
    assert jnp.allclose(out, mlp_reference_f32(x, w1, b1, w2, b2),
                        atol=1e-1, rtol=1e-1)

    # Larger, non-multiple N (3 grid steps incl. a partial last block) to exercise
    # the pipelined / megacore path with no N-padding waste.
    x_big = jax.random.normal(jax.random.PRNGKey(1), (1031, in_channels),
                              dtype=jnp.float32)
    out_big = jax.block_until_ready(mlp_forward(x_big, *params))
    assert out_big.shape == (1031, out_channels)
    assert jnp.allclose(out_big, mlp_reference_bf16_feed(x_big, w1, b1, w2, b2),
                        atol=1e-4, rtol=1e-4)

    print("KERNEL_OK")
</pallas_src>

<mosaic_0001>
module attributes {stable_mosaic.version = 11 : i64} {
  func.func @mlp_kernel(%arg0: i32, %arg1: memref<8x16xf32, #tpu.memory_space<vmem>>, %arg2: memref<16x32xbf16, #tpu.memory_space<vmem>>, %arg3: memref<1x32xf32, #tpu.memory_space<vmem>>, %arg4: memref<32x8xbf16, #tpu.memory_space<vmem>>, %arg5: memref<1x8xf32, #tpu.memory_space<vmem>>, %arg6: memref<8x8xf32, #tpu.memory_space<vmem>>) attributes {dimension_semantics = [#tpu.dimension_semantics<parallel>], iteration_bounds = array<i64: 1>, scalar_prefetch = 0 : i64, scratch_operands = 0 : i64, tpu.core_type = #tpu.core_type<tc>, window_params = [{transform_indices = @transform_0, window_bounds = array<i64: 8, 16>}, {pipeline_mode = #tpu.pipeline_mode<synchronous>, transform_indices = @transform_1, window_bounds = array<i64: 16, 32>}, {pipeline_mode = #tpu.pipeline_mode<synchronous>, transform_indices = @transform_2, window_bounds = array<i64: 1, 32>}, {pipeline_mode = #tpu.pipeline_mode<synchronous>, transform_indices = @transform_3, window_bounds = array<i64: 32, 8>}, {pipeline_mode = #tpu.pipeline_mode<synchronous>, transform_indices = @transform_4, window_bounds = array<i64: 1, 8>}, {transform_indices = @transform_5, window_bounds = array<i64: 8, 8>}]} {
    %c0 = arith.constant 0 : index
    %c0_0 = arith.constant 0 : index
    %0 = vector.load %arg1[%c0, %c0_0] : memref<8x16xf32, #tpu.memory_space<vmem>>, vector<8x16xf32>
    %1 = arith.truncf %0 : vector<8x16xf32> to vector<8x16xbf16>
    %c0_1 = arith.constant 0 : index
    %c0_2 = arith.constant 0 : index
    %2 = vector.load %arg2[%c0_1, %c0_2] : memref<16x32xbf16, #tpu.memory_space<vmem>>, vector<16x32xbf16>
    %cst = arith.constant dense<0.000000e+00> : vector<8x32xf32>
    %3 = tpu.matmul %1, %2, %cst {dimension_numbers = #tpu.dot_dimension_numbers<[1], [0], [0], [1], [0, 0, 1, 1], [], []>} : vector<8x16xbf16>, vector<16x32xbf16>, vector<8x32xf32> -> vector<8x32xf32>
    %c0_3 = arith.constant 0 : index
    %c0_4 = arith.constant 0 : index
    %4 = vector.load %arg3[%c0_3, %c0_4] : memref<1x32xf32, #tpu.memory_space<vmem>>, vector<1x32xf32>
    %5 = vector.broadcast %4 : vector<1x32xf32> to vector<8x32xf32>
    %6 = arith.addf %3, %5 : vector<8x32xf32>
    %cst_5 = arith.constant 0.000000e+00 : f32
    %7 = vector.broadcast %cst_5 : f32 to vector<8x32xf32>
    %8 = arith.maximumf %6, %7 : vector<8x32xf32>
    %9 = arith.truncf %8 : vector<8x32xf32> to vector<8x32xbf16>
    %c0_6 = arith.constant 0 : index
    %c0_7 = arith.constant 0 : index
    %10 = vector.load %arg4[%c0_6, %c0_7] : memref<32x8xbf16, #tpu.memory_space<vmem>>, vector<32x8xbf16>
    %cst_8 = arith.constant dense<0.000000e+00> : vector<8x8xf32>
    %11 = tpu.matmul %9, %10, %cst_8 {dimension_numbers = #tpu.dot_dimension_numbers<[1], [0], [0], [1], [0, 0, 1, 1], [], []>} : vector<8x32xbf16>, vector<32x8xbf16>, vector<8x8xf32> -> vector<8x8xf32>
    %c0_9 = arith.constant 0 : index
    %c0_10 = arith.constant 0 : index
    %12 = vector.load %arg5[%c0_9, %c0_10] : memref<1x8xf32, #tpu.memory_space<vmem>>, vector<1x8xf32>
    %13 = vector.broadcast %12 : vector<1x8xf32> to vector<8x8xf32>
    %14 = arith.addf %11, %13 : vector<8x8xf32>
    %cst_11 = arith.constant 0.000000e+00 : f32
    %15 = vector.broadcast %cst_11 : f32 to vector<8x8xf32>
    %16 = arith.maximumf %14, %15 : vector<8x8xf32>
    %c0_12 = arith.constant 0 : index
    %c0_13 = arith.constant 0 : index
    %17 = vector.load %arg6[%c0_12, %c0_13] : memref<8x8xf32, #tpu.memory_space<vmem>>, vector<8x8xf32>
    tpu.vector_store %arg6[%c0_12, %c0_13], %16 {strides = array<i32>} : memref<8x8xf32, #tpu.memory_space<vmem>>, vector<8x8xf32>,
    return
  }
  func.func @transform_0(%arg0: i32) -> (i32, i32) {
    %c0_i32 = arith.constant 0 : i32
    %c0_i32_0 = arith.constant 0 : i32
    return %arg0, %c0_i32 : i32, i32
  }
  func.func @transform_1(%arg0: i32) -> (i32, i32) {
    %c0_i32 = arith.constant 0 : i32
    %c0_i32_0 = arith.constant 0 : i32
    %c0_i32_1 = arith.constant 0 : i32
    return %c0_i32, %c0_i32_0 : i32, i32
  }
  func.func @transform_2(%arg0: i32) -> (i32, i32) {
    %c0_i32 = arith.constant 0 : i32
    %c0_i32_0 = arith.constant 0 : i32
    %c0_i32_1 = arith.constant 0 : i32
    return %c0_i32, %c0_i32_0 : i32, i32
  }
  func.func @transform_3(%arg0: i32) -> (i32, i32) {
    %c0_i32 = arith.constant 0 : i32
    %c0_i32_0 = arith.constant 0 : i32
    %c0_i32_1 = arith.constant 0 : i32
    return %c0_i32, %c0_i32_0 : i32, i32
  }
  func.func @transform_4(%arg0: i32) -> (i32, i32) {
    %c0_i32 = arith.constant 0 : i32
    %c0_i32_0 = arith.constant 0 : i32
    %c0_i32_1 = arith.constant 0 : i32
    return %c0_i32, %c0_i32_0 : i32, i32
  }
  func.func @transform_5(%arg0: i32) -> (i32, i32) {
    %c0_i32 = arith.constant 0 : i32
    %c0_i32_0 = arith.constant 0 : i32
    return %arg0, %c0_i32 : i32, i32
  }
}

module attributes {stable_mosaic.version = 11 : i64} {
  func.func @mlp_kernel(%arg0: i32, %arg1: memref<8x16xf32, #tpu.memory_space<vmem>>, %arg2: memref<16x32xbf16, #tpu.memory_space<vmem>>, %arg3: memref<1x32xf32, #tpu.memory_space<vmem>>, %arg4: memref<32x8xbf16, #tpu.memory_space<vmem>>, %arg5: memref<1x8xf32, #tpu.memory_space<vmem>>, %arg6: memref<8x8xf32, #tpu.memory_space<vmem>>) attributes {dimension_semantics = [#tpu.dimension_semantics<parallel>], iteration_bounds = array<i64: 1>, scalar_prefetch = 0 : i64, scratch_operands = 0 : i64, tpu.core_type = #tpu.core_type<tc>, window_params = [{transform_indices = @transform_0, window_bounds = array<i64: 8, 16>}, {pipeline_mode = #tpu.pipeline_mode<synchronous>, transform_indices = @transform_1, window_bounds = array<i64: 16, 32>}, {pipeline_mode = #tpu.pipeline_mode<synchronous>, transform_indices = @transform_2, window_bounds = array<i64: 1, 32>}, {pipeline_mode = #tpu.pipeline_mode<synchronous>, transform_indices = @transform_3, window_bounds = array<i64: 32, 8>}, {pipeline_mode = #tpu.pipeline_mode<synchronous>, transform_indices = @transform_4, window_bounds = array<i64: 1, 8>}, {transform_indices = @transform_5, window_bounds = array<i64: 8, 8>}]} {
    %c0 = arith.constant 0 : index
    %c0_0 = arith.constant 0 : index
    %0 = vector.load %arg1[%c0, %c0_0] : memref<8x16xf32, #tpu.memory_space<vmem>>, vector<8x16xf32>
    %1 = arith.truncf %0 : vector<8x16xf32> to vector<8x16xbf16>
    %c0_1 = arith.constant 0 : index
    %c0_2 = arith.constant 0 : index
    %2 = vector.load %arg2[%c0_1, %c0_2] : memref<16x32xbf16, #tpu.memory_space<vmem>>, vector<16x32xbf16>
    %cst = arith.constant dense<0.000000e+00> : vector<8x32xf32>
    %3 = tpu.matmul %1, %2, %cst {dimension_numbers = #tpu.dot_dimension_numbers<[1], [0], [0], [1], [0, 0, 1, 1], [], []>} : vector<8x16xbf16>, vector<16x32xbf16>, vector<8x32xf32> -> vector<8x32xf32>
    %c0_3 = arith.constant 0 : index
    %c0_4 = arith.constant 0 : index
    %4 = vector.load %arg3[%c0_3, %c0_4] : memref<1x32xf32, #tpu.memory_space<vmem>>, vector<1x32xf32>
    %5 = vector.broadcast %4 : vector<1x32xf32> to vector<8x32xf32>
    %6 = arith.addf %3, %5 : vector<8x32xf32>
    %cst_5 = arith.constant 0.000000e+00 : f32
    %7 = vector.broadcast %cst_5 : f32 to vector<8x32xf32>
    %8 = arith.maximumf %6, %7 : vector<8x32xf32>
    %9 = arith.truncf %8 : vector<8x32xf32> to vector<8x32xbf16>
    %c0_6 = arith.constant 0 : index
    %c0_7 = arith.constant 0 : index
    %10 = vector.load %arg4[%c0_6, %c0_7] : memref<32x8xbf16, #tpu.memory_space<vmem>>, vector<32x8xbf16>
    %cst_8 = arith.constant dense<0.000000e+00> : vector<8x8xf32>
    %11 = tpu.matmul %9, %10, %cst_8 {dimension_numbers = #tpu.dot_dimension_numbers<[1], [0], [0], [1], [0, 0, 1, 1], [], []>} : vector<8x32xbf16>, vector<32x8xbf16>, vector<8x8xf32> -> vector<8x8xf32>
    %c0_9 = arith.constant 0 : index
    %c0_10 = arith.constant 0 : index
    %12 = vector.load %arg5[%c0_9, %c0_10] : memref<1x8xf32, #tpu.memory_space<vmem>>, vector<1x8xf32>
    %13 = vector.broadcast %12 : vector<1x8xf32> to vector<8x8xf32>
    %14 = arith.addf %11, %13 : vector<8x8xf32>
    %cst_11 = arith.constant 0.000000e+00 : f32
    %15 = vector.broadcast %cst_11 : f32 to vector<8x8xf32>
    %16 = arith.maximumf %14, %15 : vector<8x8xf32>
    %c0_12 = arith.constant 0 : index
    %c0_13 = arith.constant 0 : index
    %17 = vector.load %arg6[%c0_12, %c0_13] : memref<8x8xf32, #tpu.memory_space<vmem>>, vector<8x8xf32>
    tpu.vector_store %arg6[%c0_12, %c0_13], %16 {strides = array<i32>} : memref<8x8xf32, #tpu.memory_space<vmem>>, vector<8x8xf32>,
    return
  }
  func.func @transform_0(%arg0: i32) -> (i32, i32) {
    %c0_i32 = arith.constant 0 : i32
    %c0_i32_0 = arith.constant 0 : i32
    return %arg0, %c0_i32 : i32, i32
  }
  func.func @transform_1(%arg0: i32) -> (i32, i32) {
    %c0_i32 = arith.constant 0 : i32
    %c0_i32_0 = arith.constant 0 : i32
    %c0_i32_1 = arith.constant 0 : i32
    return %c0_i32, %c0_i32_0 : i32, i32
  }
  func.func @transform_2(%arg0: i32) -> (i32, i32) {
    %c0_i32 = arith.constant 0 : i32
    %c0_i32_0 = arith.constant 0 : i32
    %c0_i32_1 = arith.constant 0 : i32
    return %c0_i32, %c0_i32_0 : i32, i32
  }
  func.func @transform_3(%arg0: i32) -> (i32, i32) {
    %c0_i32 = arith.constant 0 : i32
    %c0_i32_0 = arith.constant 0 : i32
    %c0_i32_1 = arith.constant 0 : i32
    return %c0_i32, %c0_i32_0 : i32, i32
  }
  func.func @transform_4(%arg0: i32) -> (i32, i32) {
    %c0_i32 = arith.constant 0 : i32
    %c0_i32_0 = arith.constant 0 : i32
    %c0_i32_1 = arith.constant 0 : i32
    return %c0_i32, %c0_i32_0 : i32, i32
  }
  func.func @transform_5(%arg0: i32) -> (i32, i32) {
    %c0_i32 = arith.constant 0 : i32
    %c0_i32_0 = arith.constant 0 : i32
    return %arg0, %c0_i32 : i32, i32
  }
}

</mosaic_0001>

<llo_original>
// kernel: tpu_custom_call.1
$region0: #{tpu_custom_call.1}
  #allocation0 [shape = 'u32[]', space=smem, size = 0x4, offset = 0x4, fixed_abs, tag = 'smem constant byte address 0x4 - core index']
  #allocation1 [shape = 'u32[144,128]{1,0:T(1,128)}', space=vmem, size = 0x12000, scoped, tag = 'internal scratch']
  %s0 = inlined_call_operand.vmem [shape: f32[8,16], index: 0, kind: input, shape index: {}]
  %s1 = inlined_call_operand.vmem [shape: bf16[16,32], index: 1, kind: input, shape index: {}]
  %s2 = inlined_call_operand.vmem [shape: f32[1,32], index: 2, kind: input, shape index: {}]
  %s3 = inlined_call_operand.vmem [shape: bf16[32,8], index: 3, kind: input, shape index: {}]
  %s4 = inlined_call_operand.vmem [shape: f32[1,8], index: 4, kind: input, shape index: {}]
  %s5 = inlined_call_operand.hbm [shape: f32[8,8], index: 5, kind: output, shape index: {}]
  %s6 = sld [smem:[#allocation0]]
  $region30: #{tpu_custom_call.1} parent=0
    _
  %s8 = ssub.s32 1, %s6
  %s9 = scalar_select 0, %s8, %s6
  $region1: #{tpu_custom_call.1} parent=0
    #allocation2 [shape = 'u8[4096]{0}', space=vmem, size = 0x1000, scoped, tag = 'output window, operand 0, single buffered']
    #allocation3 [shape = 's32[1]{0}', space=sflag, size = 0x4, scoped, tag = 'scoped memory for tpu_custom_call.1']
    %10 = vsyncpa [#allocation3], 0
    // Predicated region
    $region2: #{tpu_custom_call.1} parent=1 // pred_check
      _
    $region3: #{tpu_custom_call.1} parent=1 // pred_check_branch
      %12 = sbr.rel (0) target = $region5
    $region4: #{tpu_custom_call.1} parent=1 // pred_region
      _
    $region5: #{tpu_custom_call.1} parent=1 // pred_fallthru
      _
    // Predicated region
    $region6: #{tpu_custom_call.1} parent=1 // pred_check
      _
    $region7: #{tpu_custom_call.1} parent=1 // pred_check_branch
      %14 = sbr.rel (0) target = $region9
    $region8: #{tpu_custom_call.1} parent=1 // pred_region
      _
    $region9: #{tpu_custom_call.1} parent=1 // pred_fallthru
      _
    // Predicated region
    $region10: #{tpu_custom_call.1} parent=1 // pred_check
      _
    $region11: #{tpu_custom_call.1} parent=1 // pred_check_branch
      %16 = sbr.rel (0) target = $region13
    $region12: #{tpu_custom_call.1} parent=1 // pred_region
      _
    $region13: #{tpu_custom_call.1} parent=1 // pred_fallthru
      _
    // Predicated region
    $region14: #{tpu_custom_call.1} parent=1 // pred_check
      _
    $region15: #{tpu_custom_call.1} parent=1 // pred_check_branch
      %18 = sbr.rel (0) target = $region17
    $region16: #{tpu_custom_call.1} parent=1 // pred_region
      _
    $region17: #{tpu_custom_call.1} parent=1 // pred_fallthru
      _
    // Predicated region
    $region18: #{tpu_custom_call.1} parent=1 // pred_check
      _
    $region19: #{tpu_custom_call.1} parent=1 // pred_check_branch
      %20 = sbr.rel (0) target = $region21
    $region20: #{tpu_custom_call.1} parent=1 // pred_region
      _
    $region21: #{tpu_custom_call.1} parent=1 // pred_fallthru
      _
    %v22 = vld [vmem:[%s0] sm:$0xff]
    %v23 = vpack.c.bf16 %v22, %v22
    %v24 = vld [vmem:[%s1] sm:$0xf]
    %v25 = vld [vmem:[%s1 + $0x4] sm:$0xf]
    %v26 = vld [vmem:[%s2] sm:$0x1]
    %v28 = vlaneseq
    %v29 = vshrl.u32 %v28, 7
    %v30 = vsub.s32 0, %v29
    %v31 = vrot.slane %v26, %v30
    %v35 = vunpack.c.l.b16 %v24
    %v36 = vunpack.c.l.b16 %v25
    %v37 = vpack.c.b16 %v36, %v35
    %vm39 = vcmask 130048
    %v41 = vsel %vm39, %v23, 0
    %43 = vmatprep.subr.bf16.mxu0 0
    %44 = vmatpush1.bf16.msra.mxu0 %v37
    %45 = vmatprep.subr.bf16.mxu0 0
    %46 = vmatpush1.bf16.msra.mxu0 0
    %47 = vmatprep.subr.bf16.mxu0 0
    %48 = vmatpush1.bf16.msra.mxu0 0
    %49 = vmatprep.subr.bf16.mxu0 0
    %50 = vmatpush1.bf16.msra.mxu0 0
    %51 = vmatprep.subr.bf16.mxu0 0
    %52 = vmatpush1.bf16.msra.mxu0 0
    %53 = vmatprep.subr.bf16.mxu0 0
    %54 = vmatpush1.bf16.msra.mxu0 0
    %55 = vmatprep.subr.bf16.mxu0 0
    %56 = vmatpush1.bf16.msra.mxu0 0
    %57 = vmatprep.subr.bf16.mxu0 0
    %58 = vmatpush1.bf16.msra.mxu0 0
    %59 = vmatprep.subr.bf16.mxu0 0
    %60 = vmatpush1.bf16.msra.mxu0 0
    %61 = vmatprep.subr.bf16.mxu0 0
    %62 = vmatpush1.bf16.msra.mxu0 0
    %63 = vmatprep.subr.bf16.mxu0 0
    %64 = vmatpush1.bf16.msra.mxu0 0
    %65 = vmatprep.subr.bf16.mxu0 0
    %66 = vmatpush1.bf16.msra.mxu0 0
    %67 = vmatprep.subr.bf16.mxu0 0
    %68 = vmatpush1.bf16.msra.mxu0 0
    %69 = vmatprep.subr.bf16.mxu0 0
    %70 = vmatpush1.bf16.msra.mxu0 0
    %71 = vmatprep.subr.bf16.mxu0 0
    %72 = vmatpush1.bf16.msra.mxu0 0
    %73 = vmatprep.subr.bf16.mxu0 0
    %74 = vmatpush1.bf16.msra.mxu0 0
    %75 = vmatprep.mubr.bf16.mxu0 0
    %76 = vmatmul.mubr.bf16.gmra.mrb[0].mxu0 %v41
    %v77 = vpop.f32.mrb[0].mxu0
    %v78 = vadd.f32 %v31, %v77
    %v79 = vpop.f32.mrb[0].mxu0
    %v80 = vpop.f32.mrb[0].mxu0
    %v81 = vpop.f32.mrb[0].mxu0
    %82 = vdwg.mxu0
    %v83 = vmax.f32 %v78, 0.0
    %v84 = vpack.c.bf16 %v83, %v83
    %v85 = vld [vmem:[%s3] sm:$0xf]
    %v86 = vld [vmem:[%s3 + $0x4] sm:$0xf]
    %v87 = vld [vmem:[%s3 + $0x8] sm:$0xf]
    %v88 = vld [vmem:[%s3 + $0xc] sm:$0xf]
    %v89 = vld [vmem:[%s4] sm:$0x1]
    %v91 = vlaneseq
    %v92 = vshrl.u32 %v91, 7
    %v93 = vsub.s32 0, %v92
    %v94 = vrot.slane %v89, %v93
    %v100 = vunpack.c.l.b16 %v85
    %v101 = vunpack.c.l.b16 %v86
    %v102 = vunpack.c.l.b16 %v87
    %v103 = vunpack.c.l.b16 %v88
    %v104 = vpack.c.b16 %v101, %v100
    %v105 = vpack.c.b16 %v103, %v102
    %vm108 = vcmask 261120
    %v110 = vsel %vm108, %v84, 0
    %112 = vmatprep.subr.bf16.mxu0 0
    %113 = vmatpush1.bf16.msra.mxu0 %v104
    %114 = vmatprep.subr.bf16.mxu0 0
    %115 = vmatpush1.bf16.msra.mxu0 %v105
    %116 = vmatprep.subr.bf16.mxu0 0
    %117 = vmatpush1.bf16.msra.mxu0 0
    %118 = vmatprep.subr.bf16.mxu0 0
    %119 = vmatpush1.bf16.msra.mxu0 0
    %120 = vmatprep.subr.bf16.mxu0 0
    %121 = vmatpush1.bf16.msra.mxu0 0
    %122 = vmatprep.subr.bf16.mxu0 0
    %123 = vmatpush1.bf16.msra.mxu0 0
    %124 = vmatprep.subr.bf16.mxu0 0
    %125 = vmatpush1.bf16.msra.mxu0 0
    %126 = vmatprep.subr.bf16.mxu0 0
    %127 = vmatpush1.bf16.msra.mxu0 0
    %128 = vmatprep.subr.bf16.mxu0 0
    %129 = vmatpush1.bf16.msra.mxu0 0
    %130 = vmatprep.subr.bf16.mxu0 0
    %131 = vmatpush1.bf16.msra.mxu0 0
    %132 = vmatprep.subr.bf16.mxu0 0
    %133 = vmatpush1.bf16.msra.mxu0 0
    %134 = vmatprep.subr.bf16.mxu0 0
    %135 = vmatpush1.bf16.msra.mxu0 0
    %136 = vmatprep.subr.bf16.mxu0 0
    %137 = vmatpush1.bf16.msra.mxu0 0
    %138 = vmatprep.subr.bf16.mxu0 0
    %139 = vmatpush1.bf16.msra.mxu0 0
    %140 = vmatprep.subr.bf16.mxu0 0
    %141 = vmatpush1.bf16.msra.mxu0 0
    %142 = vmatprep.subr.bf16.mxu0 0
    %143 = vmatpush1.bf16.msra.mxu0 0
    %144 = vmatprep.mubr.bf16.mxu0 0
    %145 = vmatmul.mubr.bf16.gmra.mrb[0].mxu0 %v110
    %v146 = vpop.f32.mrb[0].mxu0
    %v147 = vadd.f32 %v94, %v146
    %v148 = vpop.f32.mrb[0].mxu0
    %v149 = vpop.f32.mrb[0].mxu0
    %v150 = vpop.f32.mrb[0].mxu0
    %151 = vdwg.mxu0
    %v152 = vmax.f32 %v147, 0.0
    %vm153 = vcmask 64512
    %154 = vst.msk [vmem:[#allocation2] sm:$0xff] %vm153, %v152
    // Predicated region
    $region22: #{tpu_custom_call.1} parent=1 // pred_check
      _
    $region23: #{tpu_custom_call.1} parent=1 // pred_check_branch
      %156 = sbr.rel (0) target = $region25
    $region24: #{tpu_custom_call.1} parent=1 // pred_region
      %s158 = ssub.s32 128, 128
      %159 = vsyncadd [#allocation3], %s158
      %s161 = sshll.u32 [#allocation2], 4
      %s162 = int_to_ptr.vmem [resolvable:$true] %s161
      %164 = dma.vmem_to_hbm [thread:$0]  %s162, 128, %s5, [#allocation3]
    $region25: #{tpu_custom_call.1} parent=1 // pred_fallthru
      _
    // Predicated region
    $region26: #{tpu_custom_call.1} parent=1 // pred_check
      _
    $region27: #{tpu_custom_call.1} parent=1 // pred_check_branch
      %166 = sbr.rel (0) target = $region29
    $region28: #{tpu_custom_call.1} parent=1 // pred_region
      %167 = dma.done [#allocation3], 128
    $region29: #{tpu_custom_call.1} parent=1 // pred_fallthru
      _
    %168 = vsyncpa [#allocation3], 1

// kernel: tpu_custom_call.1
$region0: #{tpu_custom_call.1}
  #allocation0 [shape = 'u32[]', space=smem, size = 0x4, offset = 0x4, fixed_abs, tag = 'smem constant byte address 0x4 - core index']
  #allocation1 [shape = 'u32[144,128]{1,0:T(1,128)}', space=vmem, size = 0x12000, scoped, tag = 'internal scratch']
  %s0 = inlined_call_operand.vmem [shape: f32[8,16], index: 0, kind: input, shape index: {}]
  %s1 = inlined_call_operand.vmem [shape: bf16[16,32], index: 1, kind: input, shape index: {}]
  %s2 = inlined_call_operand.vmem [shape: f32[1,32], index: 2, kind: input, shape index: {}]
  %s3 = inlined_call_operand.vmem [shape: bf16[32,8], index: 3, kind: input, shape index: {}]
  %s4 = inlined_call_operand.vmem [shape: f32[1,8], index: 4, kind: input, shape index: {}]
  %s5 = inlined_call_operand.hbm [shape: f32[8,8], index: 5, kind: output, shape index: {}]
  %s6 = sld [smem:[#allocation0]]
  $region30: #{tpu_custom_call.1} parent=0
    _
  %s8 = ssub.s32 1, %s6
  %s9 = scalar_select 0, %s8, %s6
  $region1: #{tpu_custom_call.1} parent=0
    #allocation2 [shape = 'u8[4096]{0}', space=vmem, size = 0x1000, scoped, tag = 'output window, operand 0, single buffered']
    #allocation3 [shape = 's32[1]{0}', space=sflag, size = 0x4, scoped, tag = 'scoped memory for tpu_custom_call.1']
    %10 = vsyncpa [#allocation3], 0
    // Predicated region
    $region2: #{tpu_custom_call.1} parent=1 // pred_check
      _
    $region3: #{tpu_custom_call.1} parent=1 // pred_check_branch
      %12 = sbr.rel (0) target = $region5
    $region4: #{tpu_custom_call.1} parent=1 // pred_region
      _
    $region5: #{tpu_custom_call.1} parent=1 // pred_fallthru
      _
    // Predicated region
    $region6: #{tpu_custom_call.1} parent=1 // pred_check
      _
    $region7: #{tpu_custom_call.1} parent=1 // pred_check_branch
      %14 = sbr.rel (0) target = $region9
    $region8: #{tpu_custom_call.1} parent=1 // pred_region
      _
    $region9: #{tpu_custom_call.1} parent=1 // pred_fallthru
      _
    // Predicated region
    $region10: #{tpu_custom_call.1} parent=1 // pred_check
      _
    $region11: #{tpu_custom_call.1} parent=1 // pred_check_branch
      %16 = sbr.rel (0) target = $region13
    $region12: #{tpu_custom_call.1} parent=1 // pred_region
      _
    $region13: #{tpu_custom_call.1} parent=1 // pred_fallthru
      _
    // Predicated region
    $region14: #{tpu_custom_call.1} parent=1 // pred_check
      _
    $region15: #{tpu_custom_call.1} parent=1 // pred_check_branch
      %18 = sbr.rel (0) target = $region17
    $region16: #{tpu_custom_call.1} parent=1 // pred_region
      _
    $region17: #{tpu_custom_call.1} parent=1 // pred_fallthru
      _
    // Predicated region
    $region18: #{tpu_custom_call.1} parent=1 // pred_check
      _
    $region19: #{tpu_custom_call.1} parent=1 // pred_check_branch
      %20 = sbr.rel (0) target = $region21
    $region20: #{tpu_custom_call.1} parent=1 // pred_region
      _
    $region21: #{tpu_custom_call.1} parent=1 // pred_fallthru
      _
    %v22 = vld [vmem:[%s0] sm:$0xff]
    %v23 = vpack.c.bf16 %v22, %v22
    %v24 = vld [vmem:[%s1] sm:$0xf]
    %v25 = vld [vmem:[%s1 + $0x4] sm:$0xf]
    %v26 = vld [vmem:[%s2] sm:$0x1]
    %v28 = vlaneseq
    %v29 = vshrl.u32 %v28, 7
    %v30 = vsub.s32 0, %v29
    %v31 = vrot.slane %v26, %v30
    %v35 = vunpack.c.l.b16 %v24
    %v36 = vunpack.c.l.b16 %v25
    %v37 = vpack.c.b16 %v36, %v35
    %vm39 = vcmask 130048
    %v41 = vsel %vm39, %v23, 0
    %43 = vmatprep.subr.bf16.mxu0 0
    %44 = vmatpush1.bf16.msra.mxu0 %v37
    %45 = vmatprep.subr.bf16.mxu0 0
    %46 = vmatpush1.bf16.msra.mxu0 0
    %47 = vmatprep.subr.bf16.mxu0 0
    %48 = vmatpush1.bf16.msra.mxu0 0
    %49 = vmatprep.subr.bf16.mxu0 0
    %50 = vmatpush1.bf16.msra.mxu0 0
    %51 = vmatprep.subr.bf16.mxu0 0
    %52 = vmatpush1.bf16.msra.mxu0 0
    %53 = vmatprep.subr.bf16.mxu0 0
    %54 = vmatpush1.bf16.msra.mxu0 0
    %55 = vmatprep.subr.bf16.mxu0 0
    %56 = vmatpush1.bf16.msra.mxu0 0
    %57 = vmatprep.subr.bf16.mxu0 0
    %58 = vmatpush1.bf16.msra.mxu0 0
    %59 = vmatprep.subr.bf16.mxu0 0
    %60 = vmatpush1.bf16.msra.mxu0 0
    %61 = vmatprep.subr.bf16.mxu0 0
    %62 = vmatpush1.bf16.msra.mxu0 0
    %63 = vmatprep.subr.bf16.mxu0 0
    %64 = vmatpush1.bf16.msra.mxu0 0
    %65 = vmatprep.subr.bf16.mxu0 0
    %66 = vmatpush1.bf16.msra.mxu0 0
    %67 = vmatprep.subr.bf16.mxu0 0
    %68 = vmatpush1.bf16.msra.mxu0 0
    %69 = vmatprep.subr.bf16.mxu0 0
    %70 = vmatpush1.bf16.msra.mxu0 0
    %71 = vmatprep.subr.bf16.mxu0 0
    %72 = vmatpush1.bf16.msra.mxu0 0
    %73 = vmatprep.subr.bf16.mxu0 0
    %74 = vmatpush1.bf16.msra.mxu0 0
    %75 = vmatprep.mubr.bf16.mxu0 0
    %76 = vmatmul.mubr.bf16.gmra.mrb[0].mxu0 %v41
    %v77 = vpop.f32.mrb[0].mxu0
    %v78 = vadd.f32 %v31, %v77
    %v79 = vpop.f32.mrb[0].mxu0
    %v80 = vpop.f32.mrb[0].mxu0
    %v81 = vpop.f32.mrb[0].mxu0
    %82 = vdwg.mxu0
    %v83 = vmax.f32 %v78, 0.0
    %v84 = vpack.c.bf16 %v83, %v83
    %v85 = vld [vmem:[%s3] sm:$0xf]
    %v86 = vld [vmem:[%s3 + $0x4] sm:$0xf]
    %v87 = vld [vmem:[%s3 + $0x8] sm:$0xf]
    %v88 = vld [vmem:[%s3 + $0xc] sm:$0xf]
    %v89 = vld [vmem:[%s4] sm:$0x1]
    %v91 = vlaneseq
    %v92 = vshrl.u32 %v91, 7
    %v93 = vsub.s32 0, %v92
    %v94 = vrot.slane %v89, %v93
    %v100 = vunpack.c.l.b16 %v85
    %v101 = vunpack.c.l.b16 %v86
    %v102 = vunpack.c.l.b16 %v87
    %v103 = vunpack.c.l.b16 %v88
    %v104 = vpack.c.b16 %v101, %v100
    %v105 = vpack.c.b16 %v103, %v102
    %vm108 = vcmask 261120
    %v110 = vsel %vm108, %v84, 0
    %112 = vmatprep.subr.bf16.mxu0 0
    %113 = vmatpush1.bf16.msra.mxu0 %v104
    %114 = vmatprep.subr.bf16.mxu0 0
    %115 = vmatpush1.bf16.msra.mxu0 %v105
    %116 = vmatprep.subr.bf16.mxu0 0
    %117 = vmatpush1.bf16.msra.mxu0 0
    %118 = vmatprep.subr.bf16.mxu0 0
    %119 = vmatpush1.bf16.msra.mxu0 0
    %120 = vmatprep.subr.bf16.mxu0 0
    %121 = vmatpush1.bf16.msra.mxu0 0
    %122 = vmatprep.subr.bf16.mxu0 0
    %123 = vmatpush1.bf16.msra.mxu0 0
    %124 = vmatprep.subr.bf16.mxu0 0
    %125 = vmatpush1.bf16.msra.mxu0 0
    %126 = vmatprep.subr.bf16.mxu0 0
    %127 = vmatpush1.bf16.msra.mxu0 0
    %128 = vmatprep.subr.bf16.mxu0 0
    %129 = vmatpush1.bf16.msra.mxu0 0
    %130 = vmatprep.subr.bf16.mxu0 0
    %131 = vmatpush1.bf16.msra.mxu0 0
    %132 = vmatprep.subr.bf16.mxu0 0
    %133 = vmatpush1.bf16.msra.mxu0 0
    %134 = vmatprep.subr.bf16.mxu0 0
    %135 = vmatpush1.bf16.msra.mxu0 0
    %136 = vmatprep.subr.bf16.mxu0 0
    %137 = vmatpush1.bf16.msra.mxu0 0
    %138 = vmatprep.subr.bf16.mxu0 0
    %139 = vmatpush1.bf16.msra.mxu0 0
    %140 = vmatprep.subr.bf16.mxu0 0
    %141 = vmatpush1.bf16.msra.mxu0 0
    %142 = vmatprep.subr.bf16.mxu0 0
    %143 = vmatpush1.bf16.msra.mxu0 0
    %144 = vmatprep.mubr.bf16.mxu0 0
    %145 = vmatmul.mubr.bf16.gmra.mrb[0].mxu0 %v110
    %v146 = vpop.f32.mrb[0].mxu0
    %v147 = vadd.f32 %v94, %v146
    %v148 = vpop.f32.mrb[0].mxu0
    %v149 = vpop.f32.mrb[0].mxu0
    %v150 = vpop.f32.mrb[0].mxu0
    %151 = vdwg.mxu0
    %v152 = vmax.f32 %v147, 0.0
    %vm153 = vcmask 64512
    %154 = vst.msk [vmem:[#allocation2] sm:$0xff] %vm153, %v152
    // Predicated region
    $region22: #{tpu_custom_call.1} parent=1 // pred_check
      _
    $region23: #{tpu_custom_call.1} parent=1 // pred_check_branch
      %156 = sbr.rel (0) target = $region25
    $region24: #{tpu_custom_call.1} parent=1 // pred_region
      %s158 = ssub.s32 128, 128
      %159 = vsyncadd [#allocation3], %s158
      %s161 = sshll.u32 [#allocation2], 4
      %s162 = int_to_ptr.vmem [resolvable:$true] %s161
      %164 = dma.vmem_to_hbm [thread:$0]  %s162, 128, %s5, [#allocation3]
    $region25: #{tpu_custom_call.1} parent=1 // pred_fallthru
      _
    // Predicated region
    $region26: #{tpu_custom_call.1} parent=1 // pred_check
      _
    $region27: #{tpu_custom_call.1} parent=1 // pred_check_branch
      %166 = sbr.rel (0) target = $region29
    $region28: #{tpu_custom_call.1} parent=1 // pred_region
      %167 = dma.done [#allocation3], 128
    $region29: #{tpu_custom_call.1} parent=1 // pred_fallthru
      _
    %168 = vsyncpa [#allocation3], 1

</llo_original>
